<compile_context>
chip_gen: v7x
topology: tpu7x:2x2x1
jax: 0.10.0
libtpu: 0.0.40
codegen_flags: <defaults>
</compile_context>

<pallas_src>
import functools

import jax
import jax.numpy as jnp
from jax.experimental import pallas as pl
from jax.experimental.pallas import tpu as pltpu

LANES = 128  # batch tile granularity (lane axis)
SUBL = 8     # f32 sublane granule for feature dims


def mlp_kernel(x_ref,
               w1_ref, b1_ref,
               w2_ref, b2_ref,
               w3_ref, b3_ref,
               w4_ref, b4_ref,
               o_ref):
    # Feature-major: x_ref is (in_p, tb); w{i} is (out_p, in_p); b{i} is (out_p, 1).
    h = x_ref[...]

    # layer 1: Linear + ReLU  (zero-padded rows/cols stay exactly 0 through ReLU)
    h = jnp.dot(w1_ref[...], h, preferred_element_type=jnp.float32) + b1_ref[...]
    h = jnp.maximum(h, 0.0)

    # layer 2: Linear + ReLU
    h = jnp.dot(w2_ref[...], h.astype(w2_ref.dtype),
                preferred_element_type=jnp.float32) + b2_ref[...]
    h = jnp.maximum(h, 0.0)

    # layer 3: Linear + ReLU
    h = jnp.dot(w3_ref[...], h.astype(w3_ref.dtype),
                preferred_element_type=jnp.float32) + b3_ref[...]
    h = jnp.maximum(h, 0.0)

    # layer 4: Linear, no activation.  (out_p, tb) store is lane-dense.
    y = jnp.dot(w4_ref[...], h.astype(w4_ref.dtype),
                preferred_element_type=jnp.float32) + b4_ref[...]
    o_ref[...] = y.astype(o_ref.dtype)


def _round_up(n, m):
    return ((n + m - 1) // m) * m


def _pad_to(a, shape):
    return jnp.pad(a, [(0, s - d) for s, d in zip(shape, a.shape)])


def _choose_batch_tile(batch, max_tile):
    """Batch rides the lane axis, so tiles are multiples of 128."""
    bp = _round_up(batch, LANES)
    if bp <= 512:
        # CartPole-scale: launch/DMA-latency floor dominates; single grid step.
        return bp, bp
    # Large batch: big tiles amortize the ~0.35 us/step grid overhead, but keep
    # >= 2 steps so the "parallel" axis shards across v7x's two TensorCores.
    tile_cap = max(LANES, (max_tile // LANES) * LANES)
    tb = min(tile_cap, _round_up(bp // 2, LANES))
    batch_p = _round_up(batch, tb)
    return tb, batch_p


def func_approx_forward(x, params, *, max_tile=4096, use_bf16=False):
    """x: (batch, input_dim) float32.

    params: dict with w{i}: (in, out) and b{i}: (1, out), i = 1..4, matching
    PyTorch's y = x @ W.T + b with W stored transposed as (in, out).
    """
    batch, in_dim = x.shape
    out_dim = params["w4"].shape[1]

    # Feature dims padded only to the 8-sublane granule (zero padding is inert).
    in_p = _round_up(in_dim, SUBL)
    h1_p = _round_up(params["w1"].shape[1], SUBL)
    h2_p = _round_up(params["w2"].shape[1], SUBL)
    h3_p = _round_up(params["w3"].shape[1], SUBL)
    out_p = _round_up(out_dim, SUBL)

    tb, batch_p = _choose_batch_tile(batch, max_tile)
    grid = (batch_p // tb,)

    io_dtype = jnp.bfloat16 if use_bf16 else jnp.float32

    # Feature-major input: (in_p, batch_p).  Padded batch columns are garbage
    # after the bias add but are sliced off below (and cost ~nothing now).
    x_t = _pad_to(x.T.astype(io_dtype), (in_p, batch_p))

    # Weights in (out, in) orientation; biases (out, 1) stay f32.
    w1 = _pad_to(params["w1"].T.astype(io_dtype), (h1_p, in_p))
    w2 = _pad_to(params["w2"].T.astype(io_dtype), (h2_p, h1_p))
    w3 = _pad_to(params["w3"].T.astype(io_dtype), (h3_p, h2_p))
    w4 = _pad_to(params["w4"].T.astype(io_dtype), (out_p, h3_p))
    b1 = _pad_to(params["b1"].T.astype(jnp.float32), (h1_p, 1))
    b2 = _pad_to(params["b2"].T.astype(jnp.float32), (h2_p, 1))
    b3 = _pad_to(params["b3"].T.astype(jnp.float32), (h3_p, 1))
    b4 = _pad_to(params["b4"].T.astype(jnp.float32), (out_p, 1))

    x_spec = pl.BlockSpec((in_p, tb), lambda i: (0, i))
    w1_spec = pl.BlockSpec((h1_p, in_p), lambda i: (0, 0))
    b1_spec = pl.BlockSpec((h1_p, 1), lambda i: (0, 0))
    w2_spec = pl.BlockSpec((h2_p, h1_p), lambda i: (0, 0))
    b2_spec = pl.BlockSpec((h2_p, 1), lambda i: (0, 0))
    w3_spec = pl.BlockSpec((h3_p, h2_p), lambda i: (0, 0))
    b3_spec = pl.BlockSpec((h3_p, 1), lambda i: (0, 0))
    w4_spec = pl.BlockSpec((out_p, h3_p), lambda i: (0, 0))
    b4_spec = pl.BlockSpec((out_p, 1), lambda i: (0, 0))
    out_spec = pl.BlockSpec((out_p, tb), lambda i: (0, i))

    out_t = pl.pallas_call(
        mlp_kernel,
        grid=grid,
        in_specs=[x_spec,
                  w1_spec, b1_spec,
                  w2_spec, b2_spec,
                  w3_spec, b3_spec,
                  w4_spec, b4_spec],
        out_specs=out_spec,
        out_shape=jax.ShapeDtypeStruct((out_p, batch_p), jnp.float32),
        compiler_params=pltpu.CompilerParams(
            dimension_semantics=("parallel",)),
    )(x_t, w1, b1, w2, b2, w3, b3, w4, b4)

    # Strip feature/batch padding and return batch-major (batch, out_dim).
    return out_t[:out_dim, :batch].T


def init_params(key, input_dim, output_dim):
    """Deterministic synthetic parameters with the same shapes as the PyTorch module."""
    dims = [(input_dim, 16), (16, 32), (32, 16), (16, output_dim)]
    params = {}
    keys = jax.random.split(key, 2 * len(dims))
    for i, (din, dout) in enumerate(dims):
        # Mirror nn.Linear's default init range: U(-1/sqrt(fan_in), 1/sqrt(fan_in)).
        bound = 1.0 / (din ** 0.5)
        w = jax.random.uniform(keys[2 * i], (din, dout), jnp.float32, -bound, bound)
        b = jax.random.uniform(keys[2 * i + 1], (1, dout), jnp.float32, -bound, bound)
        params[f"w{i + 1}"] = w
        params[f"b{i + 1}"] = b
    return params


def reference_forward(x, params):
    h = jnp.maximum(x @ params["w1"] + params["b1"], 0.0)
    h = jnp.maximum(h @ params["w2"] + params["b2"], 0.0)
    h = jnp.maximum(h @ params["w3"] + params["b3"], 0.0)
    return h @ params["w4"] + params["b4"]


if __name__ == "__main__":
    # CartPole: observation dim = 4, action dim = 2.
    input_dim, output_dim, batch = 4, 2, 8

    key = jax.random.PRNGKey(0)
    k_params, k_x = jax.random.split(key)
    params = init_params(k_params, input_dim, output_dim)
    x = jax.random.normal(k_x, (batch, input_dim), jnp.float32)

    fwd = jax.jit(functools.partial(func_approx_forward, params=params))
    out = jax.block_until_ready(fwd(x))

    ref = reference_forward(x, params)
    assert out.shape == (batch, output_dim)
    assert jnp.allclose(out, ref, atol=1e-5, rtol=1e-5), "mismatch vs JAX reference"

    # Exercise the tiled large-batch path once as well (still exact f32 numerics).
    big = 4096 + 37
    xb = jax.random.normal(jax.random.PRNGKey(1), (big, input_dim), jnp.float32)
    out_big = jax.block_until_ready(
        jax.jit(functools.partial(func_approx_forward, params=params))(xb))
    assert out_big.shape == (big, output_dim)
    assert jnp.allclose(out_big, reference_forward(xb, params), atol=1e-4, rtol=1e-4)

    print("KERNEL_OK")
</pallas_src>

<mosaic_0001>
module attributes {stable_mosaic.version = 11 : i64} {
  func.func @mlp_kernel(%arg0: i32, %arg1: memref<8x128xf32, #tpu.memory_space<vmem>>, %arg2: memref<16x8xf32, #tpu.memory_space<vmem>>, %arg3: memref<16x1xf32, #tpu.memory_space<vmem>>, %arg4: memref<32x16xf32, #tpu.memory_space<vmem>>, %arg5: memref<32x1xf32, #tpu.memory_space<vmem>>, %arg6: memref<16x32xf32, #tpu.memory_space<vmem>>, %arg7: memref<16x1xf32, #tpu.memory_space<vmem>>, %arg8: memref<8x16xf32, #tpu.memory_space<vmem>>, %arg9: memref<8x1xf32, #tpu.memory_space<vmem>>, %arg10: memref<8x128xf32, #tpu.memory_space<vmem>>) attributes {dimension_semantics = [#tpu.dimension_semantics<parallel>], iteration_bounds = array<i64: 1>, scalar_prefetch = 0 : i64, scratch_operands = 0 : i64, tpu.core_type = #tpu.core_type<tc>, window_params = [{transform_indices = @transform_0, window_bounds = array<i64: 8, 128>}, {pipeline_mode = #tpu.pipeline_mode<synchronous>, transform_indices = @transform_1, window_bounds = array<i64: 16, 8>}, {pipeline_mode = #tpu.pipeline_mode<synchronous>, transform_indices = @transform_2, window_bounds = array<i64: 16, 1>}, {pipeline_mode = #tpu.pipeline_mode<synchronous>, transform_indices = @transform_3, window_bounds = array<i64: 32, 16>}, {pipeline_mode = #tpu.pipeline_mode<synchronous>, transform_indices = @transform_4, window_bounds = array<i64: 32, 1>}, {pipeline_mode = #tpu.pipeline_mode<synchronous>, transform_indices = @transform_5, window_bounds = array<i64: 16, 32>}, {pipeline_mode = #tpu.pipeline_mode<synchronous>, transform_indices = @transform_6, window_bounds = array<i64: 16, 1>}, {pipeline_mode = #tpu.pipeline_mode<synchronous>, transform_indices = @transform_7, window_bounds = array<i64: 8, 16>}, {pipeline_mode = #tpu.pipeline_mode<synchronous>, transform_indices = @transform_8, window_bounds = array<i64: 8, 1>}, {transform_indices = @transform_9, window_bounds = array<i64: 8, 128>}]} {
    %c0 = arith.constant 0 : index
    %c0_0 = arith.constant 0 : index
    %0 = vector.load %arg1[%c0, %c0_0] : memref<8x128xf32, #tpu.memory_space<vmem>>, vector<8x128xf32>
    %c0_1 = arith.constant 0 : index
    %c0_2 = arith.constant 0 : index
    %1 = vector.load %arg2[%c0_1, %c0_2] : memref<16x8xf32, #tpu.memory_space<vmem>>, vector<16x8xf32>
    %cst = arith.constant dense<0.000000e+00> : vector<16x128xf32>
    %2 = tpu.matmul %1, %0, %cst {dimension_numbers = #tpu.dot_dimension_numbers<[1], [0], [0], [1], [0, 0, 1, 1], [], []>} : vector<16x8xf32>, vector<8x128xf32>, vector<16x128xf32> -> vector<16x128xf32>
    %c0_3 = arith.constant 0 : index
    %c0_4 = arith.constant 0 : index
    %3 = vector.load %arg3[%c0_3, %c0_4] : memref<16x1xf32, #tpu.memory_space<vmem>>, vector<16x1xf32>
    %4 = vector.broadcast %3 : vector<16x1xf32> to vector<16x128xf32>
    %5 = arith.addf %2, %4 : vector<16x128xf32>
    %cst_5 = arith.constant 0.000000e+00 : f32
    %6 = vector.broadcast %cst_5 : f32 to vector<16x128xf32>
    %7 = arith.maximumf %5, %6 : vector<16x128xf32>
    %c0_6 = arith.constant 0 : index
    %c0_7 = arith.constant 0 : index
    %8 = vector.load %arg4[%c0_6, %c0_7] : memref<32x16xf32, #tpu.memory_space<vmem>>, vector<32x16xf32>
    %cst_8 = arith.constant dense<0.000000e+00> : vector<32x128xf32>
    %9 = tpu.matmul %8, %7, %cst_8 {dimension_numbers = #tpu.dot_dimension_numbers<[1], [0], [0], [1], [0, 0, 1, 1], [], []>} : vector<32x16xf32>, vector<16x128xf32>, vector<32x128xf32> -> vector<32x128xf32>
    %c0_9 = arith.constant 0 : index
    %c0_10 = arith.constant 0 : index
    %10 = vector.load %arg5[%c0_9, %c0_10] : memref<32x1xf32, #tpu.memory_space<vmem>>, vector<32x1xf32>
    %11 = vector.broadcast %10 : vector<32x1xf32> to vector<32x128xf32>
    %12 = arith.addf %9, %11 : vector<32x128xf32>
    %cst_11 = arith.constant 0.000000e+00 : f32
    %13 = vector.broadcast %cst_11 : f32 to vector<32x128xf32>
    %14 = arith.maximumf %12, %13 : vector<32x128xf32>
    %c0_12 = arith.constant 0 : index
    %c0_13 = arith.constant 0 : index
    %15 = vector.load %arg6[%c0_12, %c0_13] : memref<16x32xf32, #tpu.memory_space<vmem>>, vector<16x32xf32>
    %cst_14 = arith.constant dense<0.000000e+00> : vector<16x128xf32>
    %16 = tpu.matmul %15, %14, %cst_14 {dimension_numbers = #tpu.dot_dimension_numbers<[1], [0], [0], [1], [0, 0, 1, 1], [], []>} : vector<16x32xf32>, vector<32x128xf32>, vector<16x128xf32> -> vector<16x128xf32>
    %c0_15 = arith.constant 0 : index
    %c0_16 = arith.constant 0 : index
    %17 = vector.load %arg7[%c0_15, %c0_16] : memref<16x1xf32, #tpu.memory_space<vmem>>, vector<16x1xf32>
    %18 = vector.broadcast %17 : vector<16x1xf32> to vector<16x128xf32>
    %19 = arith.addf %16, %18 : vector<16x128xf32>
    %cst_17 = arith.constant 0.000000e+00 : f32
    %20 = vector.broadcast %cst_17 : f32 to vector<16x128xf32>
    %21 = arith.maximumf %19, %20 : vector<16x128xf32>
    %c0_18 = arith.constant 0 : index
    %c0_19 = arith.constant 0 : index
    %22 = vector.load %arg8[%c0_18, %c0_19] : memref<8x16xf32, #tpu.memory_space<vmem>>, vector<8x16xf32>
    %cst_20 = arith.constant dense<0.000000e+00> : vector<8x128xf32>
    %23 = tpu.matmul %22, %21, %cst_20 {dimension_numbers = #tpu.dot_dimension_numbers<[1], [0], [0], [1], [0, 0, 1, 1], [], []>} : vector<8x16xf32>, vector<16x128xf32>, vector<8x128xf32> -> vector<8x128xf32>
    %c0_21 = arith.constant 0 : index
    %c0_22 = arith.constant 0 : index
    %24 = vector.load %arg9[%c0_21, %c0_22] : memref<8x1xf32, #tpu.memory_space<vmem>>, vector<8x1xf32>
    %25 = vector.broadcast %24 : vector<8x1xf32> to vector<8x128xf32>
    %26 = arith.addf %23, %25 : vector<8x128xf32>
    %c0_23 = arith.constant 0 : index
    %c0_24 = arith.constant 0 : index
    %27 = vector.load %arg10[%c0_23, %c0_24] : memref<8x128xf32, #tpu.memory_space<vmem>>, vector<8x128xf32>
    tpu.vector_store %arg10[%c0_23, %c0_24], %26 {strides = array<i32>} : memref<8x128xf32, #tpu.memory_space<vmem>>, vector<8x128xf32>,
    return
  }
  func.func @transform_0(%arg0: i32) -> (i32, i32) {
    %c0_i32 = arith.constant 0 : i32
    %c0_i32_0 = arith.constant 0 : i32
    return %c0_i32, %arg0 : i32, i32
  }
  func.func @transform_1(%arg0: i32) -> (i32, i32) {
    %c0_i32 = arith.constant 0 : i32
    %c0_i32_0 = arith.constant 0 : i32
    %c0_i32_1 = arith.constant 0 : i32
    return %c0_i32, %c0_i32_0 : i32, i32
  }
  func.func @transform_2(%arg0: i32) -> (i32, i32) {
    %c0_i32 = arith.constant 0 : i32
    %c0_i32_0 = arith.constant 0 : i32
    %c0_i32_1 = arith.constant 0 : i32
    return %c0_i32, %c0_i32_0 : i32, i32
  }
  func.func @transform_3(%arg0: i32) -> (i32, i32) {
    %c0_i32 = arith.constant 0 : i32
    %c0_i32_0 = arith.constant 0 : i32
    %c0_i32_1 = arith.constant 0 : i32
    return %c0_i32, %c0_i32_0 : i32, i32
  }
  func.func @transform_4(%arg0: i32) -> (i32, i32) {
    %c0_i32 = arith.constant 0 : i32
    %c0_i32_0 = arith.constant 0 : i32
    %c0_i32_1 = arith.constant 0 : i32
    return %c0_i32, %c0_i32_0 : i32, i32
  }
  func.func @transform_5(%arg0: i32) -> (i32, i32) {
    %c0_i32 = arith.constant 0 : i32
    %c0_i32_0 = arith.constant 0 : i32
    %c0_i32_1 = arith.constant 0 : i32
    return %c0_i32, %c0_i32_0 : i32, i32
  }
  func.func @transform_6(%arg0: i32) -> (i32, i32) {
    %c0_i32 = arith.constant 0 : i32
    %c0_i32_0 = arith.constant 0 : i32
    %c0_i32_1 = arith.constant 0 : i32
    return %c0_i32, %c0_i32_0 : i32, i32
  }
  func.func @transform_7(%arg0: i32) -> (i32, i32) {
    %c0_i32 = arith.constant 0 : i32
    %c0_i32_0 = arith.constant 0 : i32
    %c0_i32_1 = arith.constant 0 : i32
    return %c0_i32, %c0_i32_0 : i32, i32
  }
  func.func @transform_8(%arg0: i32) -> (i32, i32) {
    %c0_i32 = arith.constant 0 : i32
    %c0_i32_0 = arith.constant 0 : i32
    %c0_i32_1 = arith.constant 0 : i32
    return %c0_i32, %c0_i32_0 : i32, i32
  }
  func.func @transform_9(%arg0: i32) -> (i32, i32) {
    %c0_i32 = arith.constant 0 : i32
    %c0_i32_0 = arith.constant 0 : i32
    return %c0_i32, %arg0 : i32, i32
  }
}

</mosaic_0001>

<llo_original>
// kernel: func_approx_forward.1
$region0: #{func_approx_forward.1}
  #allocation0 [shape = 'u32[]', space=smem, size = 0x4, offset = 0x4, fixed_abs, tag = 'smem constant byte address 0x4 - core index']
  #allocation1 [shape = 'u32[144,128]{1,0:T(1,128)}', space=vmem, size = 0x12000, scoped, tag = 'internal scratch']
  %s0 = inlined_call_operand.vmem [shape: f32[8,128], index: 0, kind: input, shape index: {}]
  %s1 = inlined_call_operand.hbm [shape: f32[16,8], index: 1, kind: input, shape index: {}]
  %s2 = inlined_call_operand.hbm [shape: f32[16,1], index: 2, kind: input, shape index: {}]
  %s3 = inlined_call_operand.vmem [shape: f32[32,16], index: 3, kind: input, shape index: {}]
  %s4 = inlined_call_operand.hbm [shape: f32[32,1], index: 4, kind: input, shape index: {}]
  %s5 = inlined_call_operand.hbm [shape: f32[16,32], index: 5, kind: input, shape index: {}]
  %s6 = inlined_call_operand.hbm [shape: f32[16,1], index: 6, kind: input, shape index: {}]
  %s7 = inlined_call_operand.hbm [shape: f32[8,16], index: 7, kind: input, shape index: {}]
  %s8 = inlined_call_operand.vmem [shape: f32[8,1], index: 8, kind: input, shape index: {}]
  %s9 = inlined_call_operand.vmem [shape: f32[8,128], index: 9, kind: output, shape index: {}]
  %s10 = sld [smem:[#allocation0]]
  $region70: #{func_approx_forward.1} parent=0
    _
  %s12 = ssub.s32 1, %s10
  %s13 = scalar_select 0, %s12, %s10
  $region1: #{func_approx_forward.1} parent=0
    #allocation2 [shape = 'u8[8192]{0}', space=vmem, size = 0x2000, scoped, tag = 'input window, operand 1, single buffered']
    #allocation3 [shape = 's32[1]{0}', space=sflag, size = 0x4, scoped, tag = 'scoped memory for func_approx_forward.1']
    #allocation4 [shape = 'u8[8192]{0}', space=vmem, size = 0x2000, scoped, tag = 'input window, operand 2, single buffered']
    #allocation5 [shape = 's32[1]{0}', space=sflag, size = 0x4, scoped, tag = 'scoped memory for func_approx_forward.1']
    #allocation6 [shape = 'u8[16384]{0}', space=vmem, size = 0x4000, scoped, tag = 'input window, operand 4, single buffered']
    #allocation7 [shape = 'u8[8192]{0}', space=vmem, size = 0x2000, scoped, tag = 'input window, operand 5, single buffered']
    #allocation8 [shape = 's32[1]{0}', space=sflag, size = 0x4, scoped, tag = 'scoped memory for func_approx_forward.1']
    #allocation9 [shape = 'u8[8192]{0}', space=vmem, size = 0x2000, scoped, tag = 'input window, operand 6, single buffered']
    #allocation10 [shape = 'u8[4096]{0}', space=vmem, size = 0x1000, scoped, tag = 'input window, operand 7, single buffered']
    #allocation11 [shape = 's32[1]{0}', space=sflag, size = 0x4, scoped, tag = 'scoped memory for func_approx_forward.1']
    %14 = vsyncpa [#allocation3], 0
    %15 = vsyncpa [#allocation5], 0
    %16 = vsyncpa [#allocation8], 0
    %17 = vsyncpa [#allocation11], 0
    // Predicated region
    $region2: #{func_approx_forward.1} parent=1 // pred_check
      _
    $region3: #{func_approx_forward.1} parent=1 // pred_check_branch
      %19 = sbr.rel (0) target = $region5
    $region4: #{func_approx_forward.1} parent=1 // pred_region
      _
    $region5: #{func_approx_forward.1} parent=1 // pred_fallthru
      _
    // Predicated region
    $region6: #{func_approx_forward.1} parent=1 // pred_check
      _
    $region7: #{func_approx_forward.1} parent=1 // pred_check_branch
      %21 = sbr.rel (0) target = $region9
    $region8: #{func_approx_forward.1} parent=1 // pred_region
      %s23 = ssub.s32 256, 256
      %24 = vsyncadd [#allocation3], %s23
      %s25 = sshll.u32 [#allocation2], 4
      %s26 = int_to_ptr.vmem [resolvable:$true] %s25
      %31 = dma.hbm_to_vmem [thread:$0]  %s1, 256, %s26, [#allocation3], 128, 128, 8
    $region9: #{func_approx_forward.1} parent=1 // pred_fallthru
      _
    // Predicated region
    $region10: #{func_approx_forward.1} parent=1 // pred_check
      _
    $region11: #{func_approx_forward.1} parent=1 // pred_check_branch
      %33 = sbr.rel (0) target = $region13
    $region12: #{func_approx_forward.1} parent=1 // pred_region
      %s35 = ssub.s32 256, 256
      %36 = vsyncadd [#allocation5], %s35
      %s37 = sshll.u32 [#allocation4], 4
      %s38 = int_to_ptr.vmem [resolvable:$true] %s37
      %43 = dma.hbm_to_vmem [thread:$0]  %s2, 256, %s38, [#allocation5], 128, 128, 8
    $region13: #{func_approx_forward.1} parent=1 // pred_fallthru
      _
    // Predicated region
    $region14: #{func_approx_forward.1} parent=1 // pred_check
      _
    $region15: #{func_approx_forward.1} parent=1 // pred_check_branch
      %45 = sbr.rel (0) target = $region17
    $region16: #{func_approx_forward.1} parent=1 // pred_region
      _
    $region17: #{func_approx_forward.1} parent=1 // pred_fallthru
      _
    // Predicated region
    $region18: #{func_approx_forward.1} parent=1 // pred_check
      _
    $region19: #{func_approx_forward.1} parent=1 // pred_check_branch
      %47 = sbr.rel (0) target = $region21
    $region20: #{func_approx_forward.1} parent=1 // pred_region
      %s49 = ssub.s32 512, 512
      %50 = vsyncadd [#allocation5], %s49
      %s51 = sshll.u32 [#allocation6], 4
      %s52 = int_to_ptr.vmem [resolvable:$true] %s51
      %57 = dma.hbm_to_vmem [thread:$0]  %s4, 512, %s52, [#allocation5], 128, 128, 8
    $region21: #{func_approx_forward.1} parent=1 // pred_fallthru
      _
    // Predicated region
    $region22: #{func_approx_forward.1} parent=1 // pred_check
      _
    $region23: #{func_approx_forward.1} parent=1 // pred_check_branch
      %59 = sbr.rel (0) target = $region25
    $region24: #{func_approx_forward.1} parent=1 // pred_region
      %s61 = ssub.s32 256, 256
      %62 = vsyncadd [#allocation8], %s61
      %s63 = sshll.u32 [#allocation7], 4
      %s64 = int_to_ptr.vmem [resolvable:$true] %s63
      %69 = dma.hbm_to_vmem [thread:$0]  %s5, 256, %s64, [#allocation8], 128, 128, 8
    $region25: #{func_approx_forward.1} parent=1 // pred_fallthru
      _
    // Predicated region
    $region26: #{func_approx_forward.1} parent=1 // pred_check
      _
    $region27: #{func_approx_forward.1} parent=1 // pred_check_branch
      %71 = sbr.rel (0) target = $region29
    $region28: #{func_approx_forward.1} parent=1 // pred_region
      %s73 = ssub.s32 256, 256
      %74 = vsyncadd [#allocation8], %s73
      %s75 = sshll.u32 [#allocation9], 4
      %s76 = int_to_ptr.vmem [resolvable:$true] %s75
      %81 = dma.hbm_to_vmem [thread:$0]  %s6, 256, %s76, [#allocation8], 128, 128, 8
    $region29: #{func_approx_forward.1} parent=1 // pred_fallthru
      _
    // Predicated region
    $region30: #{func_approx_forward.1} parent=1 // pred_check
      _
    $region31: #{func_approx_forward.1} parent=1 // pred_check_branch
      %83 = sbr.rel (0) target = $region33
    $region32: #{func_approx_forward.1} parent=1 // pred_region
      %s85 = ssub.s32 128, 128
      %86 = vsyncadd [#allocation11], %s85
      %s88 = sshll.u32 [#allocation10], 4
      %s89 = int_to_ptr.vmem [resolvable:$true] %s88
      %91 = dma.hbm_to_vmem [thread:$0]  %s7, 128, %s89, [#allocation11]
    $region33: #{func_approx_forward.1} parent=1 // pred_fallthru
      _
    // Predicated region
    $region34: #{func_approx_forward.1} parent=1 // pred_check
      _
    $region35: #{func_approx_forward.1} parent=1 // pred_check_branch
      %93 = sbr.rel (0) target = $region37
    $region36: #{func_approx_forward.1} parent=1 // pred_region
      _
    $region37: #{func_approx_forward.1} parent=1 // pred_fallthru
      _
    // Predicated region
    $region38: #{func_approx_forward.1} parent=1 // pred_check
      _
    $region39: #{func_approx_forward.1} parent=1 // pred_check_branch
      %95 = sbr.rel (0) target = $region41
    $region40: #{func_approx_forward.1} parent=1 // pred_region
      %96 = dma.done [#allocation3], 256
    $region41: #{func_approx_forward.1} parent=1 // pred_fallthru
      _
    // Predicated region
    $region42: #{func_approx_forward.1} parent=1 // pred_check
      _
    $region43: #{func_approx_forward.1} parent=1 // pred_check_branch
      %98 = sbr.rel (0) target = $region45
    $region44: #{func_approx_forward.1} parent=1 // pred_region
      %99 = dma.done [#allocation5], 256
    $region45: #{func_approx_forward.1} parent=1 // pred_fallthru
      _
    // Predicated region
    $region46: #{func_approx_forward.1} parent=1 // pred_check
      _
    $region47: #{func_approx_forward.1} parent=1 // pred_check_branch
      %101 = sbr.rel (0) target = $region49
    $region48: #{func_approx_forward.1} parent=1 // pred_region
      %102 = dma.done [#allocation5], 512
    $region49: #{func_approx_forward.1} parent=1 // pred_fallthru
      _
    // Predicated region
    $region50: #{func_approx_forward.1} parent=1 // pred_check
      _
    $region51: #{func_approx_forward.1} parent=1 // pred_check_branch
      %104 = sbr.rel (0) target = $region53
    $region52: #{func_approx_forward.1} parent=1 // pred_region
      %105 = dma.done [#allocation8], 256
    $region53: #{func_approx_forward.1} parent=1 // pred_fallthru
      _
    // Predicated region
    $region54: #{func_approx_forward.1} parent=1 // pred_check
      _
    $region55: #{func_approx_forward.1} parent=1 // pred_check_branch
      %107 = sbr.rel (0) target = $region57
    $region56: #{func_approx_forward.1} parent=1 // pred_region
      %108 = dma.done [#allocation8], 256
    $region57: #{func_approx_forward.1} parent=1 // pred_fallthru
      _
    // Predicated region
    $region58: #{func_approx_forward.1} parent=1 // pred_check
      _
    $region59: #{func_approx_forward.1} parent=1 // pred_check_branch
      %110 = sbr.rel (0) target = $region61
    $region60: #{func_approx_forward.1} parent=1 // pred_region
      %111 = dma.done [#allocation11], 128
    $region61: #{func_approx_forward.1} parent=1 // pred_fallthru
      _
    %v112 = vld [vmem:[%s0] sm:$0xff]
    %v113 = vld [vmem:[#allocation2] sm:$0xff]
    %v114 = vld [vmem:[#allocation2 + $0x8] sm:$0xff]
    %v115 = vld [vmem:[#allocation4] sm:$0xff]
    %v116 = vld [vmem:[#allocation4 + $0x8] sm:$0xff]
    %118 = vset.pattern.permute.xlu0 0
    %119 = vperm.xlu0 %118, %v115
    %v120 = vpop.permute.xlu0 %119
    %123 = vset.pattern.permute.xlu0 0
    %124 = vperm.xlu0 %123, %v116
    %v125 = vpop.permute.xlu0 %124
    %vm127 = vcmask 64512
    %v129 = vsel %vm127, %v113, 0
    %v132 = vsel %vm127, %v114, 0
    %134 = vmatprep.subr.mxu0 0.0
    %135 = vmatpush1.msra.mxu0 %v112
    %136 = vmatprep.subr.mxu0 0.0
    %137 = vmatpush1.msra.mxu0 0.0
    %138 = vmatprep.subr.mxu0 0.0
    %139 = vmatpush1.msra.mxu0 0.0
    %140 = vmatprep.subr.mxu0 0.0
    %141 = vmatpush1.msra.mxu0 0.0
    %142 = vmatprep.subr.mxu0 0.0
    %143 = vmatpush1.msra.mxu0 0.0
    %144 = vmatprep.subr.mxu0 0.0
    %145 = vmatpush1.msra.mxu0 0.0
    %146 = vmatprep.subr.mxu0 0.0
    %147 = vmatpush1.msra.mxu0 0.0
    %148 = vmatprep.subr.mxu0 0.0
    %149 = vmatpush1.msra.mxu0 0.0
    %150 = vmatprep.subr.mxu0 0.0
    %151 = vmatpush1.msra.mxu0 0.0
    %152 = vmatprep.subr.mxu0 0.0
    %153 = vmatpush1.msra.mxu0 0.0
    %154 = vmatprep.subr.mxu0 0.0
    %155 = vmatpush1.msra.mxu0 0.0
    %156 = vmatprep.subr.mxu0 0.0
    %157 = vmatpush1.msra.mxu0 0.0
    %158 = vmatprep.subr.mxu0 0.0
    %159 = vmatpush1.msra.mxu0 0.0
    %160 = vmatprep.subr.mxu0 0.0
    %161 = vmatpush1.msra.mxu0 0.0
    %162 = vmatprep.subr.mxu0 0.0
    %163 = vmatpush1.msra.mxu0 0.0
    %164 = vmatprep.subr.mxu0 0.0
    %165 = vmatpush1.msra.mxu0 0.0
    %166 = vmatprep.subr.mxu0 0.0
    %167 = vmatpush1.msra.mxu0 0.0
    %168 = vmatprep.subr.mxu0 0.0
    %169 = vmatpush1.msra.mxu0 0.0
    %170 = vmatprep.subr.mxu0 0.0
    %171 = vmatpush1.msra.mxu0 0.0
    %172 = vmatprep.subr.mxu0 0.0
    %173 = vmatpush1.msra.mxu0 0.0
    %174 = vmatprep.subr.mxu0 0.0
    %175 = vmatpush1.msra.mxu0 0.0
    %176 = vmatprep.subr.mxu0 0.0
    %177 = vmatpush1.msra.mxu0 0.0
    %178 = vmatprep.subr.mxu0 0.0
    %179 = vmatpush1.msra.mxu0 0.0
    %180 = vmatprep.subr.mxu0 0.0
    %181 = vmatpush1.msra.mxu0 0.0
    %182 = vmatprep.subr.mxu0 0.0
    %183 = vmatpush1.msra.mxu0 0.0
    %184 = vmatprep.subr.mxu0 0.0
    %185 = vmatpush1.msra.mxu0 0.0
    %186 = vmatprep.subr.mxu0 0.0
    %187 = vmatpush1.msra.mxu0 0.0
    %188 = vmatprep.subr.mxu0 0.0
    %189 = vmatpush1.msra.mxu0 0.0
    %190 = vmatprep.subr.mxu0 0.0
    %191 = vmatpush1.msra.mxu0 0.0
    %192 = vmatprep.subr.mxu0 0.0
    %193 = vmatpush1.msra.mxu0 0.0
    %194 = vmatprep.subr.mxu0 0.0
    %195 = vmatpush1.msra.mxu0 0.0
    %196 = vmatprep.subr.mxu0 0.0
    %197 = vmatpush1.msra.mxu0 0.0
    %198 = vmatprep.mubr.f32.mxu0 0.0
    %199 = vmatmul.mubr.f32.gmra.mrb[0].mxu0 %v129
    %v200 = vpop.f32.mrb[0].mxu0
    %v201 = vadd.f32 %v120, %v200
    %v202 = vpop.f32.mrb[0].mxu0
    %203 = vmatprep.mubr.f32.mxu0 0.0
    %204 = vmatmul.mubr.f32.gmra.mrb[0].mxu0 %v132
    %v205 = vpop.f32.mrb[0].mxu0
    %v206 = vadd.f32 %v125, %v205
    %v207 = vpop.f32.mrb[0].mxu0
    %208 = vdwg.mxu0
    %v209 = vmax.f32 %v201, 0.0
    %v210 = vmax.f32 %v206, 0.0
    %v211 = vld [vmem:[%s3] sm:$0xff]
    %v212 = vld [vmem:[%s3 + $0x8] sm:$0xff]
    %v213 = vld [vmem:[%s3 + $0x10] sm:$0xff]
    %v214 = vld [vmem:[%s3 + $0x18] sm:$0xff]
    %v215 = vld [vmem:[#allocation6] sm:$0xff]
    %v216 = vld [vmem:[#allocation6 + $0x8] sm:$0xff]
    %v217 = vld [vmem:[#allocation6 + $0x10] sm:$0xff]
    %v218 = vld [vmem:[#allocation6 + $0x18] sm:$0xff]
    %220 = vset.pattern.permute.xlu0 0
    %221 = vperm.xlu0 %220, %v215
    %v222 = vpop.permute.xlu0 %221
    %225 = vset.pattern.permute.xlu0 0
    %226 = vperm.xlu0 %225, %v216
    %v227 = vpop.permute.xlu0 %226
    %230 = vset.pattern.permute.xlu0 0
    %231 = vperm.xlu0 %230, %v217
    %v232 = vpop.permute.xlu0 %231
    %235 = vset.pattern.permute.xlu0 0
    %236 = vperm.xlu0 %235, %v218
    %v237 = vpop.permute.xlu0 %236
    %vm239 = vcmask 130048
    %v241 = vsel %vm239, %v211, 0
    %v244 = vsel %vm239, %v212, 0
    %v247 = vsel %vm239, %v213, 0
    %v250 = vsel %vm239, %v214, 0
    %252 = vmatprep.subr.mxu0 0.0
    %253 = vmatpush1.msra.mxu0 %v209
    %254 = vmatprep.subr.mxu0 0.0
    %255 = vmatpush1.msra.mxu0 %v210
    %256 = vmatprep.subr.mxu0 0.0
    %257 = vmatpush1.msra.mxu0 0.0
    %258 = vmatprep.subr.mxu0 0.0
    %259 = vmatpush1.msra.mxu0 0.0
    %260 = vmatprep.subr.mxu0 0.0
    %261 = vmatpush1.msra.mxu0 0.0
    %262 = vmatprep.subr.mxu0 0.0
    %263 = vmatpush1.msra.mxu0 0.0
    %264 = vmatprep.subr.mxu0 0.0
    %265 = vmatpush1.msra.mxu0 0.0
    %266 = vmatprep.subr.mxu0 0.0
    %267 = vmatpush1.msra.mxu0 0.0
    %268 = vmatprep.subr.mxu0 0.0
    %269 = vmatpush1.msra.mxu0 0.0
    %270 = vmatprep.subr.mxu0 0.0
    %271 = vmatpush1.msra.mxu0 0.0
    %272 = vmatprep.subr.mxu0 0.0
    %273 = vmatpush1.msra.mxu0 0.0
    %274 = vmatprep.subr.mxu0 0.0
    %275 = vmatpush1.msra.mxu0 0.0
    %276 = vmatprep.subr.mxu0 0.0
    %277 = vmatpush1.msra.mxu0 0.0
    %278 = vmatprep.subr.mxu0 0.0
    %279 = vmatpush1.msra.mxu0 0.0
    %280 = vmatprep.subr.mxu0 0.0
    %281 = vmatpush1.msra.mxu0 0.0
    %282 = vmatprep.subr.mxu0 0.0
    %283 = vmatpush1.msra.mxu0 0.0
    %284 = vmatprep.subr.mxu0 0.0
    %285 = vmatpush1.msra.mxu0 0.0
    %286 = vmatprep.subr.mxu0 0.0
    %287 = vmatpush1.msra.mxu0 0.0
    %288 = vmatprep.subr.mxu0 0.0
    %289 = vmatpush1.msra.mxu0 0.0
    %290 = vmatprep.subr.mxu0 0.0
    %291 = vmatpush1.msra.mxu0 0.0
    %292 = vmatprep.subr.mxu0 0.0
    %293 = vmatpush1.msra.mxu0 0.0
    %294 = vmatprep.subr.mxu0 0.0
    %295 = vmatpush1.msra.mxu0 0.0
    %296 = vmatprep.subr.mxu0 0.0
    %297 = vmatpush1.msra.mxu0 0.0
    %298 = vmatprep.subr.mxu0 0.0
    %299 = vmatpush1.msra.mxu0 0.0
    %300 = vmatprep.subr.mxu0 0.0
    %301 = vmatpush1.msra.mxu0 0.0
    %302 = vmatprep.subr.mxu0 0.0
    %303 = vmatpush1.msra.mxu0 0.0
    %304 = vmatprep.subr.mxu0 0.0
    %305 = vmatpush1.msra.mxu0 0.0
    %306 = vmatprep.subr.mxu0 0.0
    %307 = vmatpush1.msra.mxu0 0.0
    %308 = vmatprep.subr.mxu0 0.0
    %309 = vmatpush1.msra.mxu0 0.0
    %310 = vmatprep.subr.mxu0 0.0
    %311 = vmatpush1.msra.mxu0 0.0
    %312 = vmatprep.subr.mxu0 0.0
    %313 = vmatpush1.msra.mxu0 0.0
    %314 = vmatprep.subr.mxu0 0.0
    %315 = vmatpush1.msra.mxu0 0.0
    %316 = vmatprep.mubr.f32.mxu0 0.0
    %317 = vmatmul.mubr.f32.gmra.mrb[0].mxu0 %v241
    %v318 = vpop.f32.mrb[0].mxu0
    %v319 = vadd.f32 %v222, %v318
    %v320 = vpop.f32.mrb[0].mxu0
    %321 = vmatprep.mubr.f32.mxu0 0.0
    %322 = vmatmul.mubr.f32.gmra.mrb[0].mxu0 %v244
    %v323 = vpop.f32.mrb[0].mxu0
    %v324 = vadd.f32 %v227, %v323
    %v325 = vpop.f32.mrb[0].mxu0
    %326 = vmatprep.mubr.f32.mxu0 0.0
    %327 = vmatmul.mubr.f32.gmra.mrb[0].mxu0 %v247
    %v328 = vpop.f32.mrb[0].mxu0
    %v329 = vadd.f32 %v232, %v328
    %v330 = vpop.f32.mrb[0].mxu0
    %331 = vmatprep.mubr.f32.mxu0 0.0
    %332 = vmatmul.mubr.f32.gmra.mrb[0].mxu0 %v250
    %v333 = vpop.f32.mrb[0].mxu0
    %v334 = vadd.f32 %v237, %v333
    %v335 = vpop.f32.mrb[0].mxu0
    %336 = vdwg.mxu0
    %v337 = vmax.f32 %v319, 0.0
    %v338 = vmax.f32 %v324, 0.0
    %v339 = vmax.f32 %v329, 0.0
    %v340 = vmax.f32 %v334, 0.0
    %v341 = vld [vmem:[#allocation7] sm:$0xff]
    %v342 = vld [vmem:[#allocation7 + $0x8] sm:$0xff]
    %v343 = vld [vmem:[#allocation9] sm:$0xff]
    %v344 = vld [vmem:[#allocation9 + $0x8] sm:$0xff]
    %346 = vset.pattern.permute.xlu0 0
    %347 = vperm.xlu0 %346, %v343
    %v348 = vpop.permute.xlu0 %347
    %351 = vset.pattern.permute.xlu0 0
    %352 = vperm.xlu0 %351, %v344
    %v353 = vpop.permute.xlu0 %352
    %vm355 = vcmask 261120
    %v357 = vsel %vm355, %v341, 0
    %v360 = vsel %vm355, %v342, 0
    %362 = vmatprep.subr.mxu0 0.0
    %363 = vmatpush1.msra.mxu0 %v337
    %364 = vmatprep.subr.mxu0 0.0
    %365 = vmatpush1.msra.mxu0 %v338
    %366 = vmatprep.subr.mxu0 0.0
    %367 = vmatpush1.msra.mxu0 %v339
    %368 = vmatprep.subr.mxu0 0.0
    %369 = vmatpush1.msra.mxu0 %v340
    %370 = vmatprep.subr.mxu0 0.0
    %371 = vmatpush1.msra.mxu0 0.0
    %372 = vmatprep.subr.mxu0 0.0
    %373 = vmatpush1.msra.mxu0 0.0
    %374 = vmatprep.subr.mxu0 0.0
    %375 = vmatpush1.msra.mxu0 0.0
    %376 = vmatprep.subr.mxu0 0.0
    %377 = vmatpush1.msra.mxu0 0.0
    %378 = vmatprep.subr.mxu0 0.0
    %379 = vmatpush1.msra.mxu0 0.0
    %380 = vmatprep.subr.mxu0 0.0
    %381 = vmatpush1.msra.mxu0 0.0
    %382 = vmatprep.subr.mxu0 0.0
    %383 = vmatpush1.msra.mxu0 0.0
    %384 = vmatprep.subr.mxu0 0.0
    %385 = vmatpush1.msra.mxu0 0.0
    %386 = vmatprep.subr.mxu0 0.0
    %387 = vmatpush1.msra.mxu0 0.0
    %388 = vmatprep.subr.mxu0 0.0
    %389 = vmatpush1.msra.mxu0 0.0
    %390 = vmatprep.subr.mxu0 0.0
    %391 = vmatpush1.msra.mxu0 0.0
    %392 = vmatprep.subr.mxu0 0.0
    %393 = vmatpush1.msra.mxu0 0.0
    %394 = vmatprep.subr.mxu0 0.0
    %395 = vmatpush1.msra.mxu0 0.0
    %396 = vmatprep.subr.mxu0 0.0
    %397 = vmatpush1.msra.mxu0 0.0
    %398 = vmatprep.subr.mxu0 0.0
    %399 = vmatpush1.msra.mxu0 0.0
    %400 = vmatprep.subr.mxu0 0.0
    %401 = vmatpush1.msra.mxu0 0.0
    %402 = vmatprep.subr.mxu0 0.0
    %403 = vmatpush1.msra.mxu0 0.0
    %404 = vmatprep.subr.mxu0 0.0
    %405 = vmatpush1.msra.mxu0 0.0
    %406 = vmatprep.subr.mxu0 0.0
    %407 = vmatpush1.msra.mxu0 0.0
    %408 = vmatprep.subr.mxu0 0.0
    %409 = vmatpush1.msra.mxu0 0.0
    %410 = vmatprep.subr.mxu0 0.0
    %411 = vmatpush1.msra.mxu0 0.0
    %412 = vmatprep.subr.mxu0 0.0
    %413 = vmatpush1.msra.mxu0 0.0
    %414 = vmatprep.subr.mxu0 0.0
    %415 = vmatpush1.msra.mxu0 0.0
    %416 = vmatprep.subr.mxu0 0.0
    %417 = vmatpush1.msra.mxu0 0.0
    %418 = vmatprep.subr.mxu0 0.0
    %419 = vmatpush1.msra.mxu0 0.0
    %420 = vmatprep.subr.mxu0 0.0
    %421 = vmatpush1.msra.mxu0 0.0
    %422 = vmatprep.subr.mxu0 0.0
    %423 = vmatpush1.msra.mxu0 0.0
    %424 = vmatprep.subr.mxu0 0.0
    %425 = vmatpush1.msra.mxu0 0.0
    %426 = vmatprep.mubr.f32.mxu0 0.0
    %427 = vmatmul.mubr.f32.gmra.mrb[0].mxu0 %v357
    %v428 = vpop.f32.mrb[0].mxu0
    %v429 = vadd.f32 %v348, %v428
    %v430 = vpop.f32.mrb[0].mxu0
    %431 = vmatprep.mubr.f32.mxu0 0.0
    %432 = vmatmul.mubr.f32.gmra.mrb[0].mxu0 %v360
    %v433 = vpop.f32.mrb[0].mxu0
    %v434 = vadd.f32 %v353, %v433
    %v435 = vpop.f32.mrb[0].mxu0
    %436 = vdwg.mxu0
    %v437 = vmax.f32 %v429, 0.0
    %v438 = vmax.f32 %v434, 0.0
    %v439 = vld [vmem:[#allocation10] sm:$0xff]
    %v440 = vld [vmem:[%s8] sm:$0xff]
    %442 = vset.pattern.permute.xlu0 0
    %443 = vperm.xlu0 %442, %v440
    %v444 = vpop.permute.xlu0 %443
    %v447 = vsel %vm239, %v439, 0
    %449 = vmatprep.subr.mxu0 0.0
    %450 = vmatpush1.msra.mxu0 %v437
    %451 = vmatprep.subr.mxu0 0.0
    %452 = vmatpush1.msra.mxu0 %v438
    %453 = vmatprep.subr.mxu0 0.0
    %454 = vmatpush1.msra.mxu0 0.0
    %455 = vmatprep.subr.mxu0 0.0
    %456 = vmatpush1.msra.mxu0 0.0
    %457 = vmatprep.subr.mxu0 0.0
    %458 = vmatpush1.msra.mxu0 0.0
    %459 = vmatprep.subr.mxu0 0.0
    %460 = vmatpush1.msra.mxu0 0.0
    %461 = vmatprep.subr.mxu0 0.0
    %462 = vmatpush1.msra.mxu0 0.0
    %463 = vmatprep.subr.mxu0 0.0
    %464 = vmatpush1.msra.mxu0 0.0
    %465 = vmatprep.subr.mxu0 0.0
    %466 = vmatpush1.msra.mxu0 0.0
    %467 = vmatprep.subr.mxu0 0.0
    %468 = vmatpush1.msra.mxu0 0.0
    %469 = vmatprep.subr.mxu0 0.0
    %470 = vmatpush1.msra.mxu0 0.0
    %471 = vmatprep.subr.mxu0 0.0
    %472 = vmatpush1.msra.mxu0 0.0
    %473 = vmatprep.subr.mxu0 0.0
    %474 = vmatpush1.msra.mxu0 0.0
    %475 = vmatprep.subr.mxu0 0.0
    %476 = vmatpush1.msra.mxu0 0.0
    %477 = vmatprep.subr.mxu0 0.0
    %478 = vmatpush1.msra.mxu0 0.0
    %479 = vmatprep.subr.mxu0 0.0
    %480 = vmatpush1.msra.mxu0 0.0
    %481 = vmatprep.subr.mxu0 0.0
    %482 = vmatpush1.msra.mxu0 0.0
    %483 = vmatprep.subr.mxu0 0.0
    %484 = vmatpush1.msra.mxu0 0.0
    %485 = vmatprep.subr.mxu0 0.0
    %486 = vmatpush1.msra.mxu0 0.0
    %487 = vmatprep.subr.mxu0 0.0
    %488 = vmatpush1.msra.mxu0 0.0
    %489 = vmatprep.subr.mxu0 0.0
    %490 = vmatpush1.msra.mxu0 0.0
    %491 = vmatprep.subr.mxu0 0.0
    %492 = vmatpush1.msra.mxu0 0.0
    %493 = vmatprep.subr.mxu0 0.0
    %494 = vmatpush1.msra.mxu0 0.0
    %495 = vmatprep.subr.mxu0 0.0
    %496 = vmatpush1.msra.mxu0 0.0
    %497 = vmatprep.subr.mxu0 0.0
    %498 = vmatpush1.msra.mxu0 0.0
    %499 = vmatprep.subr.mxu0 0.0
    %500 = vmatpush1.msra.mxu0 0.0
    %501 = vmatprep.subr.mxu0 0.0
    %502 = vmatpush1.msra.mxu0 0.0
    %503 = vmatprep.subr.mxu0 0.0
    %504 = vmatpush1.msra.mxu0 0.0
    %505 = vmatprep.subr.mxu0 0.0
    %506 = vmatpush1.msra.mxu0 0.0
    %507 = vmatprep.subr.mxu0 0.0
    %508 = vmatpush1.msra.mxu0 0.0
    %509 = vmatprep.subr.mxu0 0.0
    %510 = vmatpush1.msra.mxu0 0.0
    %511 = vmatprep.subr.mxu0 0.0
    %512 = vmatpush1.msra.mxu0 0.0
    %513 = vmatprep.mubr.f32.mxu0 0.0
    %514 = vmatmul.mubr.f32.gmra.mrb[0].mxu0 %v447
    %v515 = vpop.f32.mrb[0].mxu0
    %v516 = vadd.f32 %v444, %v515
    %v517 = vpop.f32.mrb[0].mxu0
    %518 = vdwg.mxu0
    %519 = vst [vmem:[%s9] sm:$0xff] %v516
    // Predicated region
    $region62: #{func_approx_forward.1} parent=1 // pred_check
      _
    $region63: #{func_approx_forward.1} parent=1 // pred_check_branch
      %521 = sbr.rel (0) target = $region65
    $region64: #{func_approx_forward.1} parent=1 // pred_region
      _
    $region65: #{func_approx_forward.1} parent=1 // pred_fallthru
      _
    // Predicated region
    $region66: #{func_approx_forward.1} parent=1 // pred_check
      _
    $region67: #{func_approx_forward.1} parent=1 // pred_check_branch
      %523 = sbr.rel (0) target = $region69
    $region68: #{func_approx_forward.1} parent=1 // pred_region
      _
    $region69: #{func_approx_forward.1} parent=1 // pred_fallthru
      _
    %524 = vsyncpa [#allocation3], 1
    %525 = vsyncpa [#allocation5], 1
    %526 = vsyncpa [#allocation8], 1
    %527 = vsyncpa [#allocation11], 1

</llo_original>
